<compile_context>
chip_gen: v6e
topology: v6e:2x2x1
jax: 0.10.0
libtpu: 0.0.40
codegen_flags: <defaults>
</compile_context>

<pallas_src>
import jax
import jax.numpy as jnp
from jax.experimental import pallas as pl
from jax.experimental.pallas import tpu as pltpu


def _self_attention_kernel(h_ref, a_ref, b_ref, pooled_ref, attn_ref, sig_ref):
    # Shapes (single invocation, no grid):
    #   h_ref:      (B, N, dim)
    #   a_ref:      (dim, da)
    #   b_ref:      (1, da)      -- b passed transposed (row) by the wrapper
    #   pooled_ref: (B, 1, dim)
    #   attn_ref:   (B, N, 1)    -- softmax(e) per item
    #   sig_ref:    (B, N, 1)    -- sigmoid(e) per item
    h3 = h_ref[...]
    a = a_ref[...]
    b_row = b_ref[...]                                               # (1, da)
    B, N, dim = h3.shape

    if N % 8 == 0:
        # One folded MXU matmul over the whole batch. The leading-dim
        # collapse/split reshapes are layout-free when N % 8 == 0.
        h2 = h3.reshape(B * N, dim)
        t = jnp.tanh(jnp.dot(h2, a, preferred_element_type=jnp.float32))  # (B*N, da)
        # e = t @ b as broadcast-multiply + lane reduce (avoid a degenerate
        # (B*N, da) x (da, 1) MXU matmul).
        e3 = jnp.sum(t * b_row, axis=1, keepdims=True).reshape(B, N, 1)
    else:
        # Fallback for N not a multiple of 8: batched matmul, no reshapes.
        t3 = jnp.tanh(jnp.einsum("bnd,da->bna", h3, a,
                                 preferred_element_type=jnp.float32))     # (B, N, da)
        e3 = jnp.sum(t3 * b_row, axis=2, keepdims=True)                   # (B, N, 1)

    # Numerically stable per-item softmax over N (sublane reductions on the
    # (B, N, 1) view); exact division for the denominator.
    m = jnp.max(e3, axis=1, keepdims=True)                           # (B, 1, 1)
    p = jnp.exp(e3 - m)                                              # (B, N, 1)
    denom = jnp.sum(p, axis=1, keepdims=True)                        # (B, 1, 1)
    attn3 = p / denom                                                # (B, N, 1)
    sig3 = jax.nn.sigmoid(e3)                                        # (B, N, 1)

    # pooled = softmax-weighted sum of rows: VPU multiply + sublane reduce
    # (no degenerate (1, N) x (N, dim) MXU matmul).
    pooled_ref[...] = jnp.sum(attn3 * h3, axis=1, keepdims=True)     # (B, 1, dim)
    attn_ref[...] = attn3
    sig_ref[...] = sig3


def self_attention_batched(h, a, b):
    """Batched forward of SelfAttentionBatch.

    h: (B, N, dim) f32, a: (dim, da) f32, b: (da, 1) f32.
    Returns (pooled (B, dim), attention (B, N), attention_sig (B, N)).
    """
    B, N, dim = h.shape
    da = a.shape[1]
    b_row = b.reshape(1, da)   # one-time lane-major layout of b, outside the kernel

    pooled, attn, sig = pl.pallas_call(
        _self_attention_kernel,
        out_shape=(
            jax.ShapeDtypeStruct((B, 1, dim), jnp.float32),
            jax.ShapeDtypeStruct((B, N, 1), jnp.float32),
            jax.ShapeDtypeStruct((B, N, 1), jnp.float32),
        ),
    )(h, a, b_row)

    return pooled.reshape(B, dim), attn.reshape(B, N), sig.reshape(B, N)


def self_attention_batch(h, a, b):
    """Single-item forward matching the PyTorch module's signature.

    h: (N, dim) -> (pooled (dim,), attention (N,), attention_sig (N,)).
    """
    pooled, attn, sig = self_attention_batched(h[None], a, b)
    return pooled[0], attn[0], sig[0]


def _xavier_uniform(key, shape, gain=1.414):
    fan_in, fan_out = shape[0], shape[1]
    bound = gain * jnp.sqrt(6.0 / (fan_in + fan_out))
    return jax.random.uniform(key, shape, jnp.float32, minval=-bound, maxval=bound)


if __name__ == "__main__":
    # Small shapes consistent with the module; the whole batch is handled in
    # one pallas_call step.
    B, N, dim, da = 4, 8, 32, 16

    key = jax.random.PRNGKey(0)
    k_h, k_a, k_b = jax.random.split(key, 3)

    h = jax.random.normal(k_h, (B, N, dim), dtype=jnp.float32)
    a = _xavier_uniform(k_a, (dim, da), gain=1.414)
    b = _xavier_uniform(k_b, (da, 1), gain=1.414)

    pooled, attention, attention_sig = self_attention_batched(h, a, b)
    jax.block_until_ready((pooled, attention, attention_sig))

    # Pure-JAX reference.
    e_ref = jnp.einsum("bna,ak->bnk", jnp.tanh(jnp.einsum("bnd,da->bna", h, a)), b)[..., 0]
    attn_ref = jax.nn.softmax(e_ref, axis=1)
    sig_ref = jax.nn.sigmoid(e_ref)
    pooled_ref = jnp.einsum("bn,bnd->bd", attn_ref, h)

    # Exact division in the kernel -> tight tolerances (only transcendental
    # implementation differences remain).
    assert jnp.allclose(pooled, pooled_ref, atol=1e-4, rtol=1e-4)
    assert jnp.allclose(attention, attn_ref, atol=1e-4, rtol=1e-4)
    assert jnp.allclose(attention_sig, sig_ref, atol=1e-4, rtol=1e-4)

    # Single-item path (exact PyTorch-module semantics: h is (N, dim)).
    p1, a1, s1 = self_attention_batch(h[0], a, b)
    jax.block_until_ready((p1, a1, s1))
    assert jnp.allclose(p1, pooled_ref[0], atol=1e-4, rtol=1e-4)
    assert jnp.allclose(a1, attn_ref[0], atol=1e-4, rtol=1e-4)
    assert jnp.allclose(s1, sig_ref[0], atol=1e-4, rtol=1e-4)

    print("KERNEL_OK")
</pallas_src>

<mosaic_0001>
module attributes {stable_mosaic.version = 11 : i64} {
  func.func @_self_attention_kernel(%arg0: memref<4x8x32xf32, #tpu.memory_space<vmem>>, %arg1: memref<32x16xf32, #tpu.memory_space<vmem>>, %arg2: memref<1x16xf32, #tpu.memory_space<vmem>>, %arg3: memref<4x1x32xf32, #tpu.memory_space<vmem>>, %arg4: memref<4x8x1xf32, #tpu.memory_space<vmem>>, %arg5: memref<4x8x1xf32, #tpu.memory_space<vmem>>) attributes {dimension_semantics = [], scalar_prefetch = 0 : i64, scratch_operands = 0 : i64, tpu.core_type = #tpu.core_type<tc>} {
    %c0 = arith.constant 0 : index
    %c0_0 = arith.constant 0 : index
    %c0_1 = arith.constant 0 : index
    %0 = vector.load %arg0[%c0, %c0_0, %c0_1] : memref<4x8x32xf32, #tpu.memory_space<vmem>>, vector<4x8x32xf32>
    %c0_2 = arith.constant 0 : index
    %c0_3 = arith.constant 0 : index
    %1 = vector.load %arg1[%c0_2, %c0_3] : memref<32x16xf32, #tpu.memory_space<vmem>>, vector<32x16xf32>
    %c0_4 = arith.constant 0 : index
    %c0_5 = arith.constant 0 : index
    %2 = vector.load %arg2[%c0_4, %c0_5] : memref<1x16xf32, #tpu.memory_space<vmem>>, vector<1x16xf32>
    %3 = vector.shape_cast %0 : vector<4x8x32xf32> to vector<32x32xf32>
    %cst = arith.constant dense<0.000000e+00> : vector<32x16xf32>
    %4 = tpu.matmul %3, %1, %cst {dimension_numbers = #tpu.dot_dimension_numbers<[1], [0], [0], [1], [0, 0, 1, 1], [], []>} : vector<32x32xf32>, vector<32x16xf32>, vector<32x16xf32> -> vector<32x16xf32>
    %5 = math.tanh %4 : vector<32x16xf32>
    %6 = vector.broadcast %2 : vector<1x16xf32> to vector<32x16xf32>
    %7 = arith.mulf %5, %6 : vector<32x16xf32>
    %cst_6 = arith.constant dense<0.000000e+00> : vector<32xf32>
    %8 = vector.multi_reduction <add>, %7, %cst_6 [1] : vector<32x16xf32> to vector<32xf32>
    %9 = vector.shape_cast %8 : vector<32xf32> to vector<32x1xf32>
    %10 = vector.shape_cast %9 : vector<32x1xf32> to vector<4x8x1xf32>
    %cst_7 = arith.constant dense<0xFF800000> : vector<4x1xf32>
    %11 = vector.multi_reduction <maximumf>, %10, %cst_7 [1] : vector<4x8x1xf32> to vector<4x1xf32>
    %12 = vector.shape_cast %11 : vector<4x1xf32> to vector<4x1x1xf32>
    %13 = vector.broadcast %12 : vector<4x1x1xf32> to vector<4x8x1xf32>
    %14 = arith.subf %10, %13 : vector<4x8x1xf32>
    %15 = math.exp %14 : vector<4x8x1xf32>
    %cst_8 = arith.constant dense<0.000000e+00> : vector<4x1xf32>
    %16 = vector.multi_reduction <add>, %15, %cst_8 [1] : vector<4x8x1xf32> to vector<4x1xf32>
    %17 = vector.shape_cast %16 : vector<4x1xf32> to vector<4x1x1xf32>
    %18 = vector.broadcast %17 : vector<4x1x1xf32> to vector<4x8x1xf32>
    %19 = arith.divf %15, %18 : vector<4x8x1xf32>
    %20 = arith.negf %10 : vector<4x8x1xf32>
    %21 = math.exp %20 : vector<4x8x1xf32>
    %cst_9 = arith.constant 1.000000e+00 : f32
    %22 = vector.broadcast %cst_9 : f32 to vector<4x8x1xf32>
    %23 = arith.addf %22, %21 : vector<4x8x1xf32>
    %24 = arith.divf %22, %23 : vector<4x8x1xf32>
    %25 = vector.broadcast %19 : vector<4x8x1xf32> to vector<4x8x32xf32>
    %26 = arith.mulf %25, %0 : vector<4x8x32xf32>
    %cst_10 = arith.constant dense<0.000000e+00> : vector<4x32xf32>
    %27 = vector.multi_reduction <add>, %26, %cst_10 [1] : vector<4x8x32xf32> to vector<4x32xf32>
    %28 = vector.shape_cast %27 : vector<4x32xf32> to vector<4x1x32xf32>
    %c0_11 = arith.constant 0 : index
    %c0_12 = arith.constant 0 : index
    %c0_13 = arith.constant 0 : index
    %29 = vector.load %arg3[%c0_11, %c0_12, %c0_13] : memref<4x1x32xf32, #tpu.memory_space<vmem>>, vector<4x1x32xf32>
    tpu.vector_store %arg3[%c0_11, %c0_12, %c0_13], %28 {strides = array<i32>} : memref<4x1x32xf32, #tpu.memory_space<vmem>>, vector<4x1x32xf32>,
    %c0_14 = arith.constant 0 : index
    %c0_15 = arith.constant 0 : index
    %c0_16 = arith.constant 0 : index
    %30 = vector.load %arg4[%c0_14, %c0_15, %c0_16] : memref<4x8x1xf32, #tpu.memory_space<vmem>>, vector<4x8x1xf32>
    tpu.vector_store %arg4[%c0_14, %c0_15, %c0_16], %19 {strides = array<i32>} : memref<4x8x1xf32, #tpu.memory_space<vmem>>, vector<4x8x1xf32>,
    %c0_17 = arith.constant 0 : index
    %c0_18 = arith.constant 0 : index
    %c0_19 = arith.constant 0 : index
    %31 = vector.load %arg5[%c0_17, %c0_18, %c0_19] : memref<4x8x1xf32, #tpu.memory_space<vmem>>, vector<4x8x1xf32>
    tpu.vector_store %arg5[%c0_17, %c0_18, %c0_19], %24 {strides = array<i32>} : memref<4x8x1xf32, #tpu.memory_space<vmem>>, vector<4x8x1xf32>,
    return
  }
}

</mosaic_0001>

<llo_original>
// kernel: tpu_custom_call.1
$region0: #{tpu_custom_call.1}
  #allocation0 [shape = 'u32[]', space=smem, size = 0x4, offset = 0x4, fixed_abs, tag = 'smem constant byte address 0x4 - core index']
  #allocation1 [shape = 'u32[144,128]{1,0:T(1,128)}', space=vmem, size = 0x12000, scoped, tag = 'internal scratch']
  %s0 = inlined_call_operand.vmem [shape: f32[4,8,32], index: 0, kind: input, shape index: {}]
  %s1 = inlined_call_operand.vmem [shape: f32[32,16], index: 1, kind: input, shape index: {}]
  %s2 = inlined_call_operand.vmem [shape: f32[1,16], index: 2, kind: input, shape index: {}]
  %s3 = inlined_call_operand.hbm [shape: f32[4,1,32], index: 3, kind: output, shape index: {0}]
  %s4 = inlined_call_operand.vmem [shape: f32[4,8,1], index: 4, kind: output, shape index: {1}]
  %s5 = inlined_call_operand.vmem [shape: f32[4,8,1], index: 5, kind: output, shape index: {2}]
  %6 = xla_tuple %s3, %s4, %s5
  %s7 = sld [smem:[#allocation0]]
  $region38: #{tpu_custom_call.1} parent=0
    _
  %s9 = ssub.s32 1, %s7
  %s10 = scalar_select 0, %s9, %s7
  $region1: #{tpu_custom_call.1} parent=0
    #allocation2 [shape = 'u8[2048]{0}', space=vmem, size = 0x800, scoped, tag = 'output window, operand 0, single buffered']
    #allocation3 [shape = 's32[1]{0}', space=sflag, size = 0x4, scoped, tag = 'scoped memory for tpu_custom_call.1']
    %11 = vsyncpa [#allocation3], 0
    // Predicated region
    $region2: #{tpu_custom_call.1} parent=1 // pred_check
      _
    $region3: #{tpu_custom_call.1} parent=1 // pred_check_branch
      %13 = sbr.rel (0) target = $region5
    $region4: #{tpu_custom_call.1} parent=1 // pred_region
      _
    $region5: #{tpu_custom_call.1} parent=1 // pred_fallthru
      _
    // Predicated region
    $region6: #{tpu_custom_call.1} parent=1 // pred_check
      _
    $region7: #{tpu_custom_call.1} parent=1 // pred_check_branch
      %15 = sbr.rel (0) target = $region9
    $region8: #{tpu_custom_call.1} parent=1 // pred_region
      _
    $region9: #{tpu_custom_call.1} parent=1 // pred_fallthru
      _
    // Predicated region
    $region10: #{tpu_custom_call.1} parent=1 // pred_check
      _
    $region11: #{tpu_custom_call.1} parent=1 // pred_check_branch
      %17 = sbr.rel (0) target = $region13
    $region12: #{tpu_custom_call.1} parent=1 // pred_region
      _
    $region13: #{tpu_custom_call.1} parent=1 // pred_fallthru
      _
    %v18 = vld [vmem:[%s0] sm:$0xff]
    %v19 = vld [vmem:[%s0 + $0x8] sm:$0xff]
    %v20 = vld [vmem:[%s0 + $0x10] sm:$0xff]
    %v21 = vld [vmem:[%s0 + $0x18] sm:$0xff]
    %v22 = vld [vmem:[%s1] sm:$0xff]
    %v23 = vld [vmem:[%s1 + $0x8] sm:$0xff]
    %v24 = vld [vmem:[%s1 + $0x10] sm:$0xff]
    %v25 = vld [vmem:[%s1 + $0x18] sm:$0xff]
    %v26 = vld [vmem:[%s2] sm:$0x1]
    %vm27 = vcmask 261120
    %v29 = vsel %vm27, %v18, 0
    %v32 = vsel %vm27, %v19, 0
    %v35 = vsel %vm27, %v20, 0
    %v38 = vsel %vm27, %v21, 0
    %40 = vmatprep.subr.mxu0 0.0
    %41 = vmatpush1.msra.mxu0 0.0
    %42 = vmatprep.subr.mxu0 0.0
    %43 = vmatpush1.msra.mxu0 0.0
    %44 = vmatprep.subr.mxu0 0.0
    %45 = vmatpush1.msra.mxu0 0.0
    %46 = vmatprep.subr.mxu0 0.0
    %47 = vmatpush1.msra.mxu0 0.0
    %48 = vmatprep.subr.mxu0 0.0
    %49 = vmatpush1.msra.mxu0 0.0
    %50 = vmatprep.subr.mxu0 0.0
    %51 = vmatpush1.msra.mxu0 0.0
    %52 = vmatprep.subr.mxu0 0.0
    %53 = vmatpush1.msra.mxu0 0.0
    %54 = vmatprep.subr.mxu0 0.0
    %55 = vmatpush1.msra.mxu0 0.0
    %56 = vmatprep.subr.mxu0 0.0
    %57 = vmatpush1.msra.mxu0 0.0
    %58 = vmatprep.subr.mxu0 0.0
    %59 = vmatpush1.msra.mxu0 0.0
    %60 = vmatprep.subr.mxu0 0.0
    %61 = vmatpush1.msra.mxu0 0.0
    %62 = vmatprep.subr.mxu0 0.0
    %63 = vmatpush1.msra.mxu0 0.0
    %64 = vmatprep.subr.mxu0 0.0
    %65 = vmatpush1.msra.mxu0 %v25
    %66 = vmatprep.subr.mxu0 0.0
    %67 = vmatpush1.msra.mxu0 %v24
    %68 = vmatprep.subr.mxu0 0.0
    %69 = vmatpush1.msra.mxu0 %v23
    %70 = vmatprep.subr.mxu0 0.0
    %71 = vmatpush1.msra.mxu0 %v22
    %72 = vmatprep.subr.mxu0 0.0
    %73 = vmatpush2.msra.mxu0 0.0
    %74 = vmatprep.subr.mxu0 0.0
    %75 = vmatpush2.msra.mxu0 0.0
    %76 = vmatprep.subr.mxu0 0.0
    %77 = vmatpush2.msra.mxu0 0.0
    %78 = vmatprep.subr.mxu0 0.0
    %79 = vmatpush2.msra.mxu0 0.0
    %80 = vmatprep.subr.mxu0 0.0
    %81 = vmatpush2.msra.mxu0 0.0
    %82 = vmatprep.subr.mxu0 0.0
    %83 = vmatpush2.msra.mxu0 0.0
    %84 = vmatprep.subr.mxu0 0.0
    %85 = vmatpush2.msra.mxu0 0.0
    %86 = vmatprep.subr.mxu0 0.0
    %87 = vmatpush2.msra.mxu0 0.0
    %88 = vmatprep.subr.mxu0 0.0
    %89 = vmatpush2.msra.mxu0 0.0
    %90 = vmatprep.subr.mxu0 0.0
    %91 = vmatpush2.msra.mxu0 0.0
    %92 = vmatprep.subr.mxu0 0.0
    %93 = vmatpush2.msra.mxu0 0.0
    %94 = vmatprep.subr.mxu0 0.0
    %95 = vmatpush2.msra.mxu0 0.0
    %96 = vmatprep.subr.mxu0 0.0
    %97 = vmatpush2.msra.mxu0 0.0
    %98 = vmatprep.subr.mxu0 0.0
    %99 = vmatpush2.msra.mxu0 0.0
    %100 = vmatprep.subr.mxu0 0.0
    %101 = vmatpush2.msra.mxu0 0.0
    %102 = vmatprep.subr.mxu0 0.0
    %103 = vmatpush2.msra.mxu0 0.0
    %104 = vmatprep.mubr.f32.mxu0 0.0
    %105 = vmatmul.mubr.f32.gmra.mxu0 %v29
    %v106 = vpop.f32.mrf.mxu0
    %v107 = vadd.f32 0.0, %v106
    %v108 = vpop.f32.mrf.mxu0
    %109 = vmatprep.mubr.f32.mxu0 0.0
    %110 = vmatmul.mubr.f32.gmra.mxu0 %v32
    %v111 = vpop.f32.mrf.mxu0
    %v112 = vadd.f32 0.0, %v111
    %v113 = vpop.f32.mrf.mxu0
    %114 = vmatprep.mubr.f32.mxu0 0.0
    %115 = vmatmul.mubr.f32.gmra.mxu0 %v35
    %v116 = vpop.f32.mrf.mxu0
    %v117 = vadd.f32 0.0, %v116
    %v118 = vpop.f32.mrf.mxu0
    %119 = vmatprep.mubr.f32.mxu0 0.0
    %120 = vmatmul.mubr.f32.gmra.mxu0 %v38
    %v121 = vpop.f32.mrf.mxu0
    %v122 = vadd.f32 0.0, %v121
    %v123 = vpop.f32.mrf.mxu0
    %124 = vdwg.mxu0
    %v125 = vtanh.pop %v107
    %v126 = vtanh.pop %v112
    %v127 = vtanh.pop %v117
    %v128 = vtanh.pop %v122
    %v130 = vlaneseq
    %v131 = vshrl.u32 %v130, 7
    %v132 = vsub.s32 0, %v131
    %v133 = vrot.slane %v26, %v132
    %v135 = vmul.f32 %v125, %v133
    %v136 = vmul.f32 %v126, %v133
    %v137 = vmul.f32 %v127, %v133
    %v138 = vmul.f32 %v128, %v133
    %vm139 = vcmask 130048
    %v140 = vsel %vm139, %v135, 0.0
    %141 = vadd.xlane.f32.xlu0 %v140
    %v142 = vpop.xlane.xlu0 %141
    %v143 = vsel %vm139, %v136, 0.0
    %144 = vadd.xlane.f32.xlu0 %v143
    %v145 = vpop.xlane.xlu0 %144
    %v146 = vsel %vm139, %v137, 0.0
    %147 = vadd.xlane.f32.xlu0 %v146
    %v148 = vpop.xlane.xlu0 %147
    %v149 = vsel %vm139, %v138, 0.0
    %150 = vadd.xlane.f32.xlu0 %v149
    %v151 = vpop.xlane.xlu0 %150
    %v152 = vrot.slane %v142, 4
    %v153 = vmax.f32 %v142, %v152
    %v154 = vrot.slane %v153, 2
    %v155 = vmax.f32 %v153, %v154
    %v156 = vrot.slane %v155, 1
    %v157 = vmax.f32 %v155, %v156
    %v158 = vrot.slane %v145, 4
    %v159 = vmax.f32 %v145, %v158
    %v160 = vrot.slane %v159, 2
    %v161 = vmax.f32 %v159, %v160
    %v162 = vrot.slane %v161, 1
    %v163 = vmax.f32 %v161, %v162
    %v164 = vrot.slane %v148, 4
    %v165 = vmax.f32 %v148, %v164
    %v166 = vrot.slane %v165, 2
    %v167 = vmax.f32 %v165, %v166
    %v168 = vrot.slane %v167, 1
    %v169 = vmax.f32 %v167, %v168
    %v170 = vrot.slane %v151, 4
    %v171 = vmax.f32 %v151, %v170
    %v172 = vrot.slane %v171, 2
    %v173 = vmax.f32 %v171, %v172
    %v174 = vrot.slane %v173, 1
    %v175 = vmax.f32 %v173, %v174
    %v176 = vsub.f32 %v142, %v157
    %v177 = vsub.f32 %v145, %v163
    %v178 = vsub.f32 %v148, %v169
    %v179 = vsub.f32 %v151, %v175
    %v180 = vmul.f32 %v176, 1.442695
    %v181 = vpow.pop %v180
    %v182 = vmul.f32 %v177, 1.442695
    %v183 = vpow.pop %v182
    %v184 = vmul.f32 %v178, 1.442695
    %v185 = vpow.pop %v184
    %v186 = vmul.f32 %v179, 1.442695
    %v187 = vpow.pop %v186
    %v188 = vrot.slane %v181, 4
    %v189 = vadd.f32 %v181, %v188
    %v190 = vrot.slane %v189, 2
    %v191 = vadd.f32 %v189, %v190
    %v192 = vrot.slane %v191, 1
    %v193 = vadd.f32 %v191, %v192
    %v194 = vrot.slane %v183, 4
    %v195 = vadd.f32 %v183, %v194
    %v196 = vrot.slane %v195, 2
    %v197 = vadd.f32 %v195, %v196
    %v198 = vrot.slane %v197, 1
    %v199 = vadd.f32 %v197, %v198
    %v200 = vrot.slane %v185, 4
    %v201 = vadd.f32 %v185, %v200
    %v202 = vrot.slane %v201, 2
    %v203 = vadd.f32 %v201, %v202
    %v204 = vrot.slane %v203, 1
    %v205 = vadd.f32 %v203, %v204
    %v206 = vrot.slane %v187, 4
    %v207 = vadd.f32 %v187, %v206
    %v208 = vrot.slane %v207, 2
    %v209 = vadd.f32 %v207, %v208
    %v210 = vrot.slane %v209, 1
    %v211 = vadd.f32 %v209, %v210
    %v212 = vrcp.pop %v193
    %v213 = vmul.f32 %v181, %v212
    %v214 = vrcp.pop %v199
    %v215 = vmul.f32 %v183, %v214
    %v216 = vrcp.pop %v205
    %v217 = vmul.f32 %v185, %v216
    %v218 = vrcp.pop %v211
    %v219 = vmul.f32 %v187, %v218
    %v220 = vxor.u32 %v142, 2147483648
    %v221 = vxor.u32 %v145, 2147483648
    %v222 = vxor.u32 %v148, 2147483648
    %v223 = vxor.u32 %v151, 2147483648
    %v224 = vmul.f32 %v220, 1.442695
    %v225 = vpow.pop %v224
    %v226 = vmul.f32 %v221, 1.442695
    %v227 = vpow.pop %v226
    %v228 = vmul.f32 %v222, 1.442695
    %v229 = vpow.pop %v228
    %v230 = vmul.f32 %v223, 1.442695
    %v231 = vpow.pop %v230
    %v232 = vadd.f32 %v225, 1.0
    %v233 = vadd.f32 %v227, 1.0
    %v234 = vadd.f32 %v229, 1.0
    %v235 = vadd.f32 %v231, 1.0
    %v236 = vrcp.pop %v232
    %v237 = vmul.f32 1.0, %v236
    %v238 = vrcp.pop %v233
    %v239 = vmul.f32 1.0, %v238
    %v240 = vrcp.pop %v234
    %v241 = vmul.f32 1.0, %v240
    %v242 = vrcp.pop %v235
    %v243 = vmul.f32 1.0, %v242
    %v244 = vmul.f32 %v213, %v18
    %v245 = vmul.f32 %v215, %v19
    %v246 = vmul.f32 %v217, %v20
    %v247 = vmul.f32 %v219, %v21
    %v248 = vsel %vm27, %v244, 0.0
    %v249 = vrot.slane %v248, 4
    %v250 = vadd.f32 %v248, %v249
    %v251 = vrot.slane %v250, 2
    %v252 = vadd.f32 %v250, %v251
    %v253 = vrot.slane %v252, 1
    %v254 = vadd.f32 %v252, %v253
    %v255 = vsel %vm27, %v245, 0.0
    %v256 = vrot.slane %v255, 4
    %v257 = vadd.f32 %v255, %v256
    %v258 = vrot.slane %v257, 2
    %v259 = vadd.f32 %v257, %v258
    %v260 = vrot.slane %v259, 1
    %v261 = vadd.f32 %v259, %v260
    %v262 = vsel %vm27, %v246, 0.0
    %v263 = vrot.slane %v262, 4
    %v264 = vadd.f32 %v262, %v263
    %v265 = vrot.slane %v264, 2
    %v266 = vadd.f32 %v264, %v265
    %v267 = vrot.slane %v266, 1
    %v268 = vadd.f32 %v266, %v267
    %v269 = vsel %vm27, %v247, 0.0
    %v270 = vrot.slane %v269, 4
    %v271 = vadd.f32 %v269, %v270
    %v272 = vrot.slane %v271, 2
    %v273 = vadd.f32 %v271, %v272
    %v274 = vrot.slane %v273, 1
    %v275 = vadd.f32 %v273, %v274
    %vm276 = vcmask 253952
    %277 = vst.msk [vmem:[#allocation2] sm:$0x1] %vm276, %v254
    %278 = vst.msk [vmem:[#allocation2 + $0x1] sm:$0x1] %vm276, %v261
    %279 = vst.msk [vmem:[#allocation2 + $0x2] sm:$0x1] %vm276, %v268
    %280 = vst.msk [vmem:[#allocation2 + $0x3] sm:$0x1] %vm276, %v275
    %vm281 = vcmask 7168
    %282 = vst.msk [vmem:[%s4] sm:$0xff] %vm281, %v213
    %283 = vst.msk [vmem:[%s4 + $0x8] sm:$0xff] %vm281, %v215
    %284 = vst.msk [vmem:[%s4 + $0x10] sm:$0xff] %vm281, %v217
    %285 = vst.msk [vmem:[%s4 + $0x18] sm:$0xff] %vm281, %v219
    %286 = vst.msk [vmem:[%s5] sm:$0xff] %vm281, %v237
    %287 = vst.msk [vmem:[%s5 + $0x8] sm:$0xff] %vm281, %v239
    %288 = vst.msk [vmem:[%s5 + $0x10] sm:$0xff] %vm281, %v241
    %289 = vst.msk [vmem:[%s5 + $0x18] sm:$0xff] %vm281, %v243
    // Predicated region
    $region14: #{tpu_custom_call.1} parent=1 // pred_check
      _
    $region15: #{tpu_custom_call.1} parent=1 // pred_check_branch
      %291 = sbr.rel (0) target = $region17
    $region16: #{tpu_custom_call.1} parent=1 // pred_region
      %s293 = ssub.s32 64, 64
      %294 = vsyncadd [#allocation3], %s293
      %s295 = sshll.u32 [#allocation2], 4
      %s296 = int_to_ptr.vmem [resolvable:$true] %s295
      %301 = dma.vmem_to_hbm [thread:$0]  %s296, 64, %s3, [#allocation3], 16, 16, 1
    $region17: #{tpu_custom_call.1} parent=1 // pred_fallthru
      _
    // Predicated region
    $region18: #{tpu_custom_call.1} parent=1 // pred_check
      _
    $region19: #{tpu_custom_call.1} parent=1 // pred_check_branch
      %303 = sbr.rel (0) target = $region21
    $region20: #{tpu_custom_call.1} parent=1 // pred_region
      _
    $region21: #{tpu_custom_call.1} parent=1 // pred_fallthru
      _
    // Predicated region
    $region22: #{tpu_custom_call.1} parent=1 // pred_check
      _
    $region23: #{tpu_custom_call.1} parent=1 // pred_check_branch
      %305 = sbr.rel (0) target = $region25
    $region24: #{tpu_custom_call.1} parent=1 // pred_region
      _
    $region25: #{tpu_custom_call.1} parent=1 // pred_fallthru
      _
    // Predicated region
    $region26: #{tpu_custom_call.1} parent=1 // pred_check
      _
    $region27: #{tpu_custom_call.1} parent=1 // pred_check_branch
      %307 = sbr.rel (0) target = $region29
    $region28: #{tpu_custom_call.1} parent=1 // pred_region
      %308 = dma.done [#allocation3], 64
    $region29: #{tpu_custom_call.1} parent=1 // pred_fallthru
      _
    // Predicated region
    $region30: #{tpu_custom_call.1} parent=1 // pred_check
      _
    $region31: #{tpu_custom_call.1} parent=1 // pred_check_branch
      %310 = sbr.rel (0) target = $region33
    $region32: #{tpu_custom_call.1} parent=1 // pred_region
      _
    $region33: #{tpu_custom_call.1} parent=1 // pred_fallthru
      _
    // Predicated region
    $region34: #{tpu_custom_call.1} parent=1 // pred_check
      _
    $region35: #{tpu_custom_call.1} parent=1 // pred_check_branch
      %312 = sbr.rel (0) target = $region37
    $region36: #{tpu_custom_call.1} parent=1 // pred_region
      _
    $region37: #{tpu_custom_call.1} parent=1 // pred_fallthru
      _
    %313 = vsyncpa [#allocation3], 1

</llo_original>
